<compile_context>
chip_gen: v5e
topology: v5e:2x2
jax: 0.10.0
libtpu: 0.0.40
codegen_flags: <defaults>
</compile_context>

<pallas_src>
import functools

import jax
import jax.numpy as jnp
from jax import lax
from jax.experimental import pallas as pl
from jax.experimental.pallas import tpu as pltpu


def _round_up(x, m):
    return ((x + m - 1) // m) * m


def _e_attention_kernel(*refs, d_orig, has_mask):
    if has_mask:
        q_ref, k_ref, v_ref, m_ref, o_ref, s1_ref, mrow_ref = refs
    else:
        q_ref, k_ref, v_ref, o_ref, s1_ref = refs
        m_ref = None
        mrow_ref = None

    qi = pl.program_id(1)

    # s1 (and the hoisted masked-row output) depend only on k/v: compute them
    # once per batch element and keep them in VMEM scratch across Lq tiles.
    @pl.when(qi == 0)
    def _():
        k = k_ref[0]                                        # (Lk, Dp)  input dtype
        v = v_ref[0]                                        # (Lk, Dvp) input dtype
        kf = k.astype(jnp.float32)
        b = jnp.sum(kf * kf, axis=-1, keepdims=True)        # (Lk, 1) f32
        inv_b = pl.reciprocal(b, approx=True)               # EUP, ~free slot
        k_scaled = (kf * inv_b).astype(k.dtype)             # input dtype for MXU
        # s1 = (k / b)^T @ v  ->  (Dp, Dvp), f32 accumulation.  Runs once per
        # batch (amortized over all Lq tiles), so any lowering-side transpose
        # of the "TN" contraction is paid once per batch only.
        s1_f32 = lax.dot_general(
            k_scaled, v,
            dimension_numbers=(((0,), (0,)), ((), ())),
            preferred_element_type=jnp.float32,
        )
        # Cast once per batch; per-tile matmul then consumes the scratch
        # directly in the MXU-native input dtype.
        s1_ref[...] = s1_f32.astype(s1_ref.dtype)
        if has_mask:
            # masked_fill_(-1e9) fills the whole score row, so the masked-row
            # output is (-1e9 / D) * sum_d s1[d, :] -- independent of q.
            mrow_ref[...] = (jnp.float32(-1.0e9) / jnp.float32(d_orig)) * jnp.sum(
                s1_f32, axis=0, keepdims=True)

    q = q_ref[0]                                            # (tq, Dp) input dtype
    qf = q.astype(jnp.float32)
    a = jnp.sum(qf * qf, axis=-1, keepdims=True)            # (tq, 1) f32
    inv_a = pl.reciprocal(a, approx=True)                   # EUP
    # Fold the final 1/D scale into the per-row factor: (tq,1) mul instead of
    # a (tq, Dvp) mul on the output.
    score = (qf * (inv_a * jnp.float32(1.0 / d_orig))).astype(q.dtype)

    out = jnp.dot(score, s1_ref[...], preferred_element_type=jnp.float32)  # (tq, Dvp)

    if has_mask:
        m = m_ref[0]                                        # (tq, 1) int32
        out = jnp.where(m > 0, mrow_ref[...], out)          # broadcast (1, Dvp)

    o_ref[0] = out.astype(o_ref.dtype)


@functools.partial(jax.jit, static_argnames=("tq_max",))
def e_attention(query, key, value, mask=None, *, tq_max=512):
    """Pallas implementation of E_Attention.forward.

    query: (B, Lq, D), key: (B, Lk, D), value: (B, Lk, Dv)
    mask : optional bool (B, Lq, 1); True entries mask the whole score row.
    Note: rows of query/key with zero squared norm produce Inf/NaN, matching
    the PyTorch reference (division by zero).
    """
    B, Lq, D = query.shape
    Bk, Lk, Dk = key.shape
    Bv, Lv, Dv = value.shape
    assert B == Bk == Bv and Lk == Lv and D == Dk
    assert tq_max % 8 == 0

    in_dtype = query.dtype
    out_dtype = query.dtype

    # Lane-dense feature dims (multiples of 128); padding is mathematically
    # exact (see header comment) and a no-op for typical model dims.
    Dp = _round_up(D, 128)
    Dvp = _round_up(Dv, 128)

    # Lq tiling: tq rows per grid step, multiple of 8, tq divides padded Lq.
    tq = min(tq_max, _round_up(Lq, 8))
    Lqp = _round_up(Lq, tq)

    q, k, v = query, key, value
    if Dp != D:
        q = jnp.pad(q, ((0, 0), (0, 0), (0, Dp - D)))
        k = jnp.pad(k, ((0, 0), (0, 0), (0, Dp - D)))
    if Dvp != Dv:
        v = jnp.pad(v, ((0, 0), (0, 0), (0, Dvp - Dv)))
    if Lqp != Lq:
        # Pad extra query rows with ones (nonzero norm -> no Inf/NaN even with
        # the approximate reciprocal); padded output rows are sliced off.
        q = jnp.pad(q, ((0, 0), (0, Lqp - Lq), (0, 0)), constant_values=1)

    has_mask = mask is not None

    inputs = [q, k, v]
    in_specs = [
        pl.BlockSpec((1, tq, Dp), lambda b, i: (b, i, 0)),    # q: per Lq tile
        pl.BlockSpec((1, Lk, Dp), lambda b, i: (b, 0, 0)),    # k: resident/batch
        pl.BlockSpec((1, Lk, Dvp), lambda b, i: (b, 0, 0)),   # v: resident/batch
    ]
    scratch_shapes = [pltpu.VMEM((Dp, Dvp), in_dtype)]        # s1 (input dtype)

    if has_mask:
        assert mask.shape == (B, Lq, 1)
        m = mask.astype(jnp.int32)
        if Lqp != Lq:
            m = jnp.pad(m, ((0, 0), (0, Lqp - Lq), (0, 0)))
        inputs.append(m)
        in_specs.append(pl.BlockSpec((1, tq, 1), lambda b, i: (b, i, 0)))
        scratch_shapes.append(pltpu.VMEM((1, Dvp), jnp.float32))  # masked-row out

    grid = (B, Lqp // tq)

    itemsize = jnp.dtype(out_dtype).itemsize
    cost = pl.CostEstimate(
        flops=2 * B * (Lk + Lqp) * Dp * Dvp,
        transcendentals=B * (Lk + Lqp),
        bytes_accessed=int(q.size * q.dtype.itemsize
                           + k.size * k.dtype.itemsize
                           + v.size * v.dtype.itemsize
                           + B * Lqp * Dvp * itemsize),
    )

    kernel = functools.partial(_e_attention_kernel, d_orig=D, has_mask=has_mask)

    out = pl.pallas_call(
        kernel,
        out_shape=jax.ShapeDtypeStruct((B, Lqp, Dvp), out_dtype),
        grid_spec=pltpu.PrefetchScalarGridSpec(
            num_scalar_prefetch=0,
            grid=grid,
            in_specs=in_specs,
            out_specs=pl.BlockSpec((1, tq, Dvp), lambda b, i: (b, i, 0)),
            scratch_shapes=scratch_shapes,
        ),
        compiler_params=pltpu.CompilerParams(
            # batch axis -> megacore; Lq-tile axis carries the s1 scratch
            # dependency so it must stay "arbitrary".
            dimension_semantics=("parallel", "arbitrary"),
            # Explicit scoped-VMEM budget: above the 16/32 MiB defaults of
            # v5e/v6e, below v7x's 64 MiB physical VMEM.
            vmem_limit_bytes=48 * 1024 * 1024,
        ),
        cost_estimate=cost,
    )(*inputs)

    if Lqp != Lq or Dvp != Dv:
        out = out[:, :Lq, :Dv]
    return out


def _reference(query, key, value, mask=None):
    # Pure-JAX (f32) mirror of the PyTorch forward, for correctness checking.
    query = query.astype(jnp.float32)
    key = key.astype(jnp.float32)
    value = value.astype(jnp.float32)
    a = jnp.sum(query ** 2, axis=-1, keepdims=True)
    b = jnp.sum(key ** 2, axis=-1, keepdims=True)
    kt = jnp.swapaxes(key, -2, -1)
    bt = jnp.swapaxes(b, -2, -1)
    s1 = jnp.matmul(kt / bt, value)
    score = query / a
    if mask is not None:
        score = jnp.where(mask, -1.0e9, score)
    s2 = jnp.matmul(score, s1)
    return s2 / query.shape[-1]


def _rel_err(out, ref):
    out = jnp.asarray(out, jnp.float32)
    ref = jnp.asarray(ref, jnp.float32)
    return float(jnp.max(jnp.abs(out - ref)) / (jnp.max(jnp.abs(ref)) + 1e-30))


if __name__ == "__main__":
    key0 = jax.random.PRNGKey(0)
    kq, kk, kv, km = jax.random.split(key0, 4)

    B, Lq, Lk, D, Dv = 2, 8, 8, 32, 32
    query = jax.random.normal(kq, (B, Lq, D), dtype=jnp.float32)
    key_t = jax.random.normal(kk, (B, Lk, D), dtype=jnp.float32)
    value = jax.random.normal(kv, (B, Lk, Dv), dtype=jnp.float32)
    mask = jax.random.bernoulli(km, p=0.25, shape=(B, Lq, 1))

    # no-mask path (f32). Tolerances account for the EUP approx reciprocal.
    out = jax.block_until_ready(e_attention(query, key_t, value))
    ref = _reference(query, key_t, value)
    assert out.shape == ref.shape
    assert _rel_err(out, ref) < 5e-2, "no-mask mismatch"

    # masked path (f32); masked rows are ~1e9-scale by construction.
    out_m = jax.block_until_ready(e_attention(query, key_t, value, mask))
    ref_m = _reference(query, key_t, value, mask)
    assert _rel_err(out_m, ref_m) < 5e-2, "masked mismatch"

    # bf16 path (exercises native bf16 MXU matmuls with f32 accumulation).
    q16 = query.astype(jnp.bfloat16)
    k16 = key_t.astype(jnp.bfloat16)
    v16 = value.astype(jnp.bfloat16)
    out16 = jax.block_until_ready(e_attention(q16, k16, v16))
    ref16 = _reference(q16, k16, v16)
    assert out16.dtype == jnp.bfloat16
    assert _rel_err(out16, ref16) < 1e-1, "bf16 mismatch"

    print("KERNEL_OK")
</pallas_src>

<mosaic_0001>
module attributes {stable_mosaic.version = 11 : i64} {
  func.func @_e_attention_kernel(%arg0: i32, %arg1: i32, %arg2: memref<1x8x128xf32, #tpu.memory_space<vmem>>, %arg3: memref<1x8x128xf32, #tpu.memory_space<vmem>>, %arg4: memref<1x8x128xf32, #tpu.memory_space<vmem>>, %arg5: memref<1x8x128xf32, #tpu.memory_space<vmem>>, %arg6: memref<128x128xf32, #tpu.memory_space<vmem>>) attributes {dimension_semantics = [#tpu.dimension_semantics<parallel>, #tpu.dimension_semantics<arbitrary>], iteration_bounds = array<i64: 2, 1>, scalar_prefetch = 0 : i64, scratch_operands = 1 : i64, tpu.core_type = #tpu.core_type<tc>, window_params = [{transform_indices = @transform_0, window_bounds = array<i64: 1, 8, 128>}, {transform_indices = @transform_1, window_bounds = array<i64: 1, 8, 128>}, {transform_indices = @transform_2, window_bounds = array<i64: 1, 8, 128>}, {transform_indices = @transform_3, window_bounds = array<i64: 1, 8, 128>}]} {
    %c0_i32 = arith.constant 0 : i32
    %0 = arith.cmpi eq, %arg1, %c0_i32 : i32
    %1 = arith.extui %0 : i1 to i32
    %c0_i32_0 = arith.constant 0 : i32
    %2 = arith.cmpi ne, %1, %c0_i32_0 : i32
    scf.if %2 {
      %c0_10 = arith.constant 0 : index
      %c0_11 = arith.constant 0 : index
      %c0_12 = arith.constant 0 : index
      %18 = vector.load %arg3[%c0_10, %c0_11, %c0_12] : memref<1x8x128xf32, #tpu.memory_space<vmem>>, vector<1x8x128xf32>
      %19 = vector.shape_cast %18 : vector<1x8x128xf32> to vector<8x128xf32>
      %c0_13 = arith.constant 0 : index
      %c0_14 = arith.constant 0 : index
      %c0_15 = arith.constant 0 : index
      %20 = vector.load %arg4[%c0_13, %c0_14, %c0_15] : memref<1x8x128xf32, #tpu.memory_space<vmem>>, vector<1x8x128xf32>
      %21 = vector.shape_cast %20 : vector<1x8x128xf32> to vector<8x128xf32>
      %22 = arith.mulf %19, %19 : vector<8x128xf32>
      %cst_16 = arith.constant dense<0.000000e+00> : vector<8xf32>
      %23 = vector.multi_reduction <add>, %22, %cst_16 [1] : vector<8x128xf32> to vector<8xf32>
      %24 = vector.shape_cast %23 : vector<8xf32> to vector<8x1xf32>
      %25 = tpu.reciprocal %24 {approx = true} : vector<8x1xf32> -> vector<8x1xf32>
      %26 = vector.broadcast %25 : vector<8x1xf32> to vector<8x128xf32>
      %27 = arith.mulf %19, %26 : vector<8x128xf32>
      %cst_17 = arith.constant dense<0.000000e+00> : vector<128x128xf32>
      %28 = tpu.matmul %27, %21, %cst_17 {dimension_numbers = #tpu.dot_dimension_numbers<[0], [0], [1], [1], [0, 1, 1, 1], [], []>} : vector<8x128xf32>, vector<8x128xf32>, vector<128x128xf32> -> vector<128x128xf32>
      %c0_18 = arith.constant 0 : index
      %c0_19 = arith.constant 0 : index
      %29 = vector.load %arg6[%c0_18, %c0_19] : memref<128x128xf32, #tpu.memory_space<vmem>>, vector<128x128xf32>
      tpu.vector_store %arg6[%c0_18, %c0_19], %28 {strides = array<i32>} : memref<128x128xf32, #tpu.memory_space<vmem>>, vector<128x128xf32>,
    } else {
    }
    %c0 = arith.constant 0 : index
    %c0_1 = arith.constant 0 : index
    %c0_2 = arith.constant 0 : index
    %3 = vector.load %arg2[%c0, %c0_1, %c0_2] : memref<1x8x128xf32, #tpu.memory_space<vmem>>, vector<1x8x128xf32>
    %4 = vector.shape_cast %3 : vector<1x8x128xf32> to vector<8x128xf32>
    %5 = arith.mulf %4, %4 : vector<8x128xf32>
    %cst = arith.constant dense<0.000000e+00> : vector<8xf32>
    %6 = vector.multi_reduction <add>, %5, %cst [1] : vector<8x128xf32> to vector<8xf32>
    %7 = vector.shape_cast %6 : vector<8xf32> to vector<8x1xf32>
    %8 = tpu.reciprocal %7 {approx = true} : vector<8x1xf32> -> vector<8x1xf32>
    %cst_3 = arith.constant 3.125000e-02 : f32
    %9 = vector.broadcast %cst_3 : f32 to vector<8x1xf32>
    %10 = arith.mulf %8, %9 : vector<8x1xf32>
    %11 = vector.broadcast %10 : vector<8x1xf32> to vector<8x128xf32>
    %12 = arith.mulf %4, %11 : vector<8x128xf32>
    %c0_4 = arith.constant 0 : index
    %c0_5 = arith.constant 0 : index
    %13 = vector.load %arg6[%c0_4, %c0_5] : memref<128x128xf32, #tpu.memory_space<vmem>>, vector<128x128xf32>
    %cst_6 = arith.constant dense<0.000000e+00> : vector<8x128xf32>
    %14 = tpu.matmul %12, %13, %cst_6 {dimension_numbers = #tpu.dot_dimension_numbers<[1], [0], [0], [1], [0, 0, 1, 1], [], []>} : vector<8x128xf32>, vector<128x128xf32>, vector<8x128xf32> -> vector<8x128xf32>
    %c0_7 = arith.constant 0 : index
    %c0_8 = arith.constant 0 : index
    %c0_9 = arith.constant 0 : index
    %15 = vector.load %arg5[%c0_7, %c0_8, %c0_9] : memref<1x8x128xf32, #tpu.memory_space<vmem>>, vector<1x8x128xf32>
    %16 = vector.shape_cast %15 : vector<1x8x128xf32> to vector<8x128xf32>
    %17 = vector.shape_cast %14 : vector<8x128xf32> to vector<1x8x128xf32>
    tpu.vector_store %arg5[%c0_7, %c0_8, %c0_9], %17 {strides = array<i32>} : memref<1x8x128xf32, #tpu.memory_space<vmem>>, vector<1x8x128xf32>,
    return
  }
  func.func @transform_0(%arg0: i32, %arg1: i32) -> (i32, i32, i32) {
    %c0_i32 = arith.constant 0 : i32
    %c0_i32_0 = arith.constant 0 : i32
    return %arg0, %arg1, %c0_i32 : i32, i32, i32
  }
  func.func @transform_1(%arg0: i32, %arg1: i32) -> (i32, i32, i32) {
    %c0_i32 = arith.constant 0 : i32
    %c0_i32_0 = arith.constant 0 : i32
    %c0_i32_1 = arith.constant 0 : i32
    return %arg0, %c0_i32, %c0_i32_0 : i32, i32, i32
  }
  func.func @transform_2(%arg0: i32, %arg1: i32) -> (i32, i32, i32) {
    %c0_i32 = arith.constant 0 : i32
    %c0_i32_0 = arith.constant 0 : i32
    %c0_i32_1 = arith.constant 0 : i32
    return %arg0, %c0_i32, %c0_i32_0 : i32, i32, i32
  }
  func.func @transform_3(%arg0: i32, %arg1: i32) -> (i32, i32, i32) {
    %c0_i32 = arith.constant 0 : i32
    %c0_i32_0 = arith.constant 0 : i32
    return %arg0, %arg1, %c0_i32 : i32, i32, i32
  }
}

</mosaic_0001>

<llo_original>
// kernel: e_attention.1
$region0: #{e_attention.1}
  #allocation0 [shape = 'u32[]', space=smem, size = 0x4, offset = 0x4, fixed_abs, tag = 'smem constant byte address 0x4 - core index']
  #allocation1 [shape = 'u32[72,128]{1,0:T(1,128)}', space=vmem, size = 0x9000, scoped, tag = 'internal scratch']
  #allocation2 [shape = 'f32[128,128]{1,0:T(8,128)}', space=vmem, size = 0x10000, scoped, tag = 'scratch operand']
  %s0 = inlined_call_operand.vmem [shape: f32[2,8,128], index: 0, kind: input, shape index: {}]
  %s1 = inlined_call_operand.vmem [shape: f32[2,8,128], index: 1, kind: input, shape index: {}]
  %s2 = inlined_call_operand.vmem [shape: f32[2,8,128], index: 2, kind: input, shape index: {}]
  %s3 = inlined_call_operand.hbm [shape: f32[2,8,128], index: 3, kind: output, shape index: {}]
  %s4 = sld [smem:[#allocation0]]
  $region49: #{e_attention.1} parent=0
    _
  %s6 = ssub.s32 1, %s4
  %s7 = scalar_select 0, %s6, %s4
  $region1: #{e_attention.1} parent=0
    #allocation3 [shape = 'u8[8192]{0}', space=vmem, size = 0x2000, scoped, tag = 'output window, operand 0']
    #allocation4 [shape = 's32[2]{0}', space=sflag, size = 0x8, scoped, tag = 'scoped memory for e_attention.1']
    %8 = vsyncpa [#allocation4], 0
    %s9 = scalar_lea.sflag [#allocation4], 1
    %10 = vsyncpa %s9, 0
    loop: start=0, step=1, limit=4
    $region2: #{e_attention.1} parent=1 // loop_pre_header
      _
    $region3: #{e_attention.1} parent=1 // loop_header
      %s12 = sphi 0, %s16
      %p13 = scmp.ge.s32.totalorder %s12, 4
      %s19 = sphi 0, %s31
      %s20 = sphi 0, %s27
      %s21 = sphi 0, %s19
      %s22 = sphi 0, %s20
      %s23 = sphi 0, %s21
      %s24 = sphi 0, %s22
      %s36 = sphi 0, %s38
      %s39 = sphi 0, %s36
      %s40 = sphi 0, %s39
      %s56 = sphi 0, %s40
      %s62 = sphi 0, %s64
      %s65 = sphi 0, %s62
      %s66 = sphi 0, %s65
      %s82 = sphi 0, %s66
      %s88 = sphi 0, %s90
      %s91 = sphi 0, %s88
      %s92 = sphi 0, %s91
      %s108 = sphi 0, %s92
      %s116 = sphi 0, %s118
      %s119 = sphi 0, %s116
      %s120 = sphi 0, %s119
      %s136 = sphi 0, %s120
    $region4: #{e_attention.1} parent=1 // loop_header_branch
      %15 = sbr.rel (%p13) target = $region8
    $region5: #{e_attention.1} parent=1 // loop_body
      %s17 = ssub.s32 %s12, 1
      %s18 = ssub.s32 %s12, 2
      %s25 = sadd.s32 1, %s20
      %p26 = scmp.ge.s32.totalorder %s25, 1
      %s27 = scalar_select %p26, 0, %s25
      %s28 = sadd.s32 1, %s19
      %s29 = scalar_select %p26, %s28, %s19
      %p30 = scmp.ge.s32.totalorder %s29, 2
      %s31 = scalar_select %p30, 0, %s29
      %s32 = ssub.s32 %s19, %s31
      %s33 = ssub.s32 %s20, %s27
      %s34 = sor.u32 %s32, %s33
      %p35 = scmp.eq.s32.totalorder %s34, 0
      %s37 = sadd.s32 %s36, 1
      %s38 = scalar_select %p35, %s36, %s37
      %p41 = pneg %p35
      %p42 = scmp.eq.s32.totalorder %s12, 1
      %p43 = por %p41, %p42
      %p44 = scmp.ne.s32.totalorder %s36, %s39
      %p45 = scmp.eq.s32.totalorder %s12, 0
      %p46 = por %p44, %p45
      %p47 = scmp.ne.s32.totalorder %s36, %s39
      %p48 = scmp.eq.s32.totalorder %s17, 1
      %p49 = por %p47, %p48
      %p50 = scmp.ne.s32.totalorder %s39, %s40
      %p51 = scmp.eq.s32.totalorder %s17, 0
      %p52 = por %p50, %p51
      %p53 = scmp.ne.s32.totalorder %s39, %s40
      %p54 = scmp.eq.s32.totalorder %s18, 1
      %p55 = por %p53, %p54
      %p57 = scmp.ne.s32.totalorder %s40, %s56
      %p58 = scmp.eq.s32.totalorder %s18, 0
      %p59 = por %p57, %p58
      %s60 = ssub.s32 %s19, %s31
      %p61 = scmp.eq.s32.totalorder %s60, 0
      %s63 = sadd.s32 %s62, 1
      %s64 = scalar_select %p61, %s62, %s63
      %p67 = pneg %p61
      %p68 = scmp.eq.s32.totalorder %s12, 1
      %p69 = por %p67, %p68
      %p70 = scmp.ne.s32.totalorder %s62, %s65
      %p71 = scmp.eq.s32.totalorder %s12, 0
      %p72 = por %p70, %p71
      %p73 = scmp.ne.s32.totalorder %s62, %s65
      %p74 = scmp.eq.s32.totalorder %s17, 1
      %p75 = por %p73, %p74
      %p76 = scmp.ne.s32.totalorder %s65, %s66
      %p77 = scmp.eq.s32.totalorder %s17, 0
      %p78 = por %p76, %p77
      %p79 = scmp.ne.s32.totalorder %s65, %s66
      %p80 = scmp.eq.s32.totalorder %s18, 1
      %p81 = por %p79, %p80
      %p83 = scmp.ne.s32.totalorder %s66, %s82
      %p84 = scmp.eq.s32.totalorder %s18, 0
      %p85 = por %p83, %p84
      %s86 = ssub.s32 %s19, %s31
      %p87 = scmp.eq.s32.totalorder %s86, 0
      %s89 = sadd.s32 %s88, 1
      %s90 = scalar_select %p87, %s88, %s89
      %p93 = pneg %p87
      %p94 = scmp.eq.s32.totalorder %s12, 1
      %p95 = por %p93, %p94
      %p96 = scmp.ne.s32.totalorder %s88, %s91
      %p97 = scmp.eq.s32.totalorder %s12, 0
      %p98 = por %p96, %p97
      %p99 = scmp.ne.s32.totalorder %s88, %s91
      %p100 = scmp.eq.s32.totalorder %s17, 1
      %p101 = por %p99, %p100
      %p102 = scmp.ne.s32.totalorder %s91, %s92
      %p103 = scmp.eq.s32.totalorder %s17, 0
      %p104 = por %p102, %p103
      %p105 = scmp.ne.s32.totalorder %s91, %s92
      %p106 = scmp.eq.s32.totalorder %s18, 1
      %p107 = por %p105, %p106
      %p109 = scmp.ne.s32.totalorder %s92, %s108
      %p110 = scmp.eq.s32.totalorder %s18, 0
      %p111 = por %p109, %p110
      %s112 = ssub.s32 %s19, %s31
      %s113 = ssub.s32 %s20, %s27
      %s114 = sor.u32 %s112, %s113
      %p115 = scmp.eq.s32.totalorder %s114, 0
      %s117 = sadd.s32 %s116, 1
      %s118 = scalar_select %p115, %s116, %s117
      %p121 = pneg %p115
      %p122 = scmp.eq.s32.totalorder %s12, 1
      %p123 = por %p121, %p122
      %p124 = scmp.ne.s32.totalorder %s116, %s119
      %p125 = scmp.eq.s32.totalorder %s12, 0
      %p126 = por %p124, %p125
      %p127 = scmp.ne.s32.totalorder %s116, %s119
      %p128 = scmp.eq.s32.totalorder %s17, 1
      %p129 = por %p127, %p128
      %p130 = scmp.ne.s32.totalorder %s119, %s120
      %p131 = scmp.eq.s32.totalorder %s17, 0
      %p132 = por %p130, %p131
      %p133 = scmp.ne.s32.totalorder %s119, %s120
      %p134 = scmp.eq.s32.totalorder %s18, 1
      %p135 = por %p133, %p134
      %p137 = scmp.ne.s32.totalorder %s120, %s136
      %p138 = scmp.eq.s32.totalorder %s18, 0
      %p139 = por %p137, %p138
      %p140 = scmp.le.s32.totalorder 1, %s12
      %p141 = scmp.lt.s32.totalorder %s12, 3
      %p142 = pnand %p140, %p141
      %p143 = pneg %p142
      // Predicated region
      $region9: #{e_attention.1} parent=5 // pred_check
        _
      $region10: #{e_attention.1} parent=5 // pred_check_branch
        %145 = sbr.rel (%p142) target = $region12
      $region11: #{e_attention.1} parent=5 // pred_region
        %s146 = ssub.s32 %s12, 1
      $region12: #{e_attention.1} parent=5 // pred_fallthru
        _
      %p147 = scmp.lt.s32.totalorder %s12, 2
      // Predicated region
      $region13: #{e_attention.1} parent=5 // pred_check
        %p148 = pneg %p147
      $region14: #{e_attention.1} parent=5 // pred_check_branch
        %150 = sbr.rel (%p148) target = $region16
      $region15: #{e_attention.1} parent=5 // pred_region
        // Predicated region
        $region17: #{e_attention.1} parent=15 // pred_check
          %p151 = pneg %p46
        $region18: #{e_attention.1} parent=15 // pred_check_branch
          %153 = sbr.rel (%p151) target = $region20
        $region19: #{e_attention.1} parent=15 // pred_region
          %p154 = scmp.lt.s32.totalorder %s19, 1
          %s155 = scalar_select %p154, %s19, 1
          %p156 = scmp.lt.s32.totalorder %s20, 0
          %s157 = scalar_select %p156, %s20, 0
          %s158 = sadd.s32 %s157, %s155
          %s159 = smul.addr %s158, 8
          %s160 = scalar_lea.vmem %s0, %s159
        $region20: #{e_attention.1} parent=15 // pred_fallthru
          _
        // Predicated region
        $region21: #{e_attention.1} parent=15 // pred_check
          %p161 = pneg %p72
        $region22: #{e_attention.1} parent=15 // pred_check_branch
          %163 = sbr.rel (%p161) target = $region24
        $region23: #{e_attention.1} parent=15 // pred_region
          %p164 = scmp.lt.s32.totalorder %s19, 1
          %s165 = scalar_select %p164, %s19, 1
          %s166 = smul.addr %s165, 8
          %s167 = scalar_lea.vmem %s1, %s166
        $region24: #{e_attention.1} parent=15 // pred_fallthru
          _
        // Predicated region
        $region25: #{e_attention.1} parent=15 // pred_check
          %p168 = pneg %p98
        $region26: #{e_attention.1} parent=15 // pred_check_branch
          %170 = sbr.rel (%p168) target = $region28
        $region27: #{e_attention.1} parent=15 // pred_region
          %p171 = scmp.lt.s32.totalorder %s19, 1
          %s172 = scalar_select %p171, %s19, 1
          %s173 = smul.addr %s172, 8
          %s174 = scalar_lea.vmem %s2, %s173
        $region28: #{e_attention.1} parent=15 // pred_fallthru
          _
      $region16: #{e_attention.1} parent=5 // pred_fallthru
        _
      %p175 = scmp.le.s32.totalorder 1, %s12
      %p176 = scmp.lt.s32.totalorder %s12, 3
      %p177 = pnand %p175, %p176
      %p178 = pneg %p177
      // Predicated region
      $region29: #{e_attention.1} parent=5 // pred_check
        _
      $region30: #{e_attention.1} parent=5 // pred_check_branch
        %180 = sbr.rel (%p177) target = $region32
      $region31: #{e_attention.1} parent=5 // pred_region
        %s181 = ssub.s32 %s12, 1
        %p182 = scmp.lt.s32.totalorder %s21, 1
        %s183 = scalar_select %p182, %s21, 1
        %p184 = scmp.lt.s32.totalorder %s22, 0
        %s185 = scalar_select %p184, %s22, 0
        %s186 = sadd.s32 %s185, %s183
        %s187 = smul.addr %s186, 8
        %s188 = scalar_lea.vmem %s0, %s187
        %p189 = pneg %p52
        %p190 = pneg %p49
        %p191 = scmp.lt.s32.totalorder %s21, 1
        %s192 = scalar_select %p191, %s21, 1
        %s193 = smul.addr %s192, 8
        %s194 = scalar_lea.vmem %s1, %s193
        %p195 = pneg %p78
        %p196 = pneg %p75
        %p197 = scmp.lt.s32.totalorder %s21, 1
        %s198 = scalar_select %p197, %s21, 1
        %s199 = smul.addr %s198, 8
        %s200 = scalar_lea.vmem %s2, %s199
        %p201 = pneg %p104
        %p202 = pneg %p101
        %p203 = pneg %p132
        %p204 = pneg %p129
        %s205 = sand.u32 %s119, 1
        %s206 = scalar_lea.sflag [#allocation4], %s205
        %s207 = sand.u32 %s119, 1
        %s208 = smul.addr %s207, 8
        %s209 = scalar_lea.vmem [#allocation3], %s208
        %p210 = scmp.lt.s32.totalorder %s21, 1
        %s211 = scalar_select %p210, %s21, 1
        %p212 = scmp.lt.s32.totalorder %s22, 0
        %s213 = scalar_select %p212, %s22, 0
        %s214 = sadd.s32 %s213, %s211
        %s215 = smul.addr %s214, 8
        %s216 = scalar_lea.vmem %s0, %s215
        %p217 = scmp.lt.s32.totalorder %s21, 1
        %s218 = scalar_select %p217, %s21, 1
        %s219 = smul.addr %s218, 8
        %s220 = scalar_lea.vmem %s1, %s219
        %p221 = scmp.lt.s32.totalorder %s21, 1
        %s222 = scalar_select %p221, %s21, 1
        %s223 = smul.addr %s222, 8
        %s224 = scalar_lea.vmem %s2, %s223
        %p225 = scmp.eq.s32.totalorder %s22, 0
        // Predicated region
        $region33: #{e_attention.1} parent=31 // pred_check
          %p226 = pneg %p225
        $region34: #{e_attention.1} parent=31 // pred_check_branch
          %228 = sbr.rel (%p226) target = $region36
        $region35: #{e_attention.1} parent=31 // pred_region
          %v229 = vld [vmem:[%s220] sm:$0xff]
          %v230 = vld [vmem:[%s224] sm:$0xff]
          %v231 = vmul.f32 %v229, %v229
          %232 = vadd.xlane.f32.xlu0 %v231
          %v233 = vpop.xlane.xlu0 %232
          %v234 = vrcp.pop %v233
          %v235 = vmul.f32 %v229, %v234
          %236 = vxpose.xlu0.b32.start [1/16] %v235, 128
          %237 = vxpose.xlu0.b32.cont [2/16] 0.0, 128
          %238 = vxpose.xlu0.b32.cont [3/16] 0.0, 128
          %239 = vxpose.xlu0.b32.cont [4/16] 0.0, 128
          %240 = vxpose.xlu0.b32.cont [5/16] 0.0, 128
          %241 = vxpose.xlu0.b32.cont [6/16] 0.0, 128
          %242 = vxpose.xlu0.b32.cont [7/16] 0.0, 128
          %243 = vxpose.xlu0.b32.cont [8/16] 0.0, 128
          %244 = vxpose.xlu0.b32.cont [9/16] 0.0, 128
          %245 = vxpose.xlu0.b32.cont [10/16] 0.0, 128
          %246 = vxpose.xlu0.b32.cont [11/16] 0.0, 128
          %247 = vxpose.xlu0.b32.cont [12/16] 0.0, 128
          %248 = vxpose.xlu0.b32.cont [13/16] 0.0, 128
          %249 = vxpose.xlu0.b32.cont [14/16] 0.0, 128
          %250 = vxpose.xlu0.b32.cont [15/16] 0.0, 128
          %251 = vxpose.xlu0.b32.end [16/16] 0.0, 128
          %v252 = vpop.trf.xlu0
          %v253 = vpop.trf.xlu0
          %v254 = vpop.trf.xlu0
          %v255 = vpop.trf.xlu0
          %v256 = vpop.trf.xlu0
          %v257 = vpop.trf.xlu0
          %v258 = vpop.trf.xlu0
          %v259 = vpop.trf.xlu0
          %v260 = vpop.trf.xlu0
          %v261 = vpop.trf.xlu0
          %v262 = vpop.trf.xlu0
          %v263 = vpop.trf.xlu0
          %v264 = vpop.trf.xlu0
          %v265 = vpop.trf.xlu0
          %v266 = vpop.trf.xlu0
          %v267 = vpop.trf.xlu0
          %vm268 = vcmask 64512
          %v270 = vsel %vm268, %v252, 0
          %v273 = vsel %vm268, %v253, 0
          %v276 = vsel %vm268, %v254, 0
          %v279 = vsel %vm268, %v255, 0
          %v282 = vsel %vm268, %v256, 0
          %v285 = vsel %vm268, %v257, 0
          %v288 = vsel %vm268, %v258, 0
          %v291 = vsel %vm268, %v259, 0
          %v294 = vsel %vm268, %v260, 0
          %v297 = vsel %vm268, %v261, 0
          %v300 = vsel %vm268, %v262, 0
          %v303 = vsel %vm268, %v263, 0
          %v306 = vsel %vm268, %v264, 0
          %v309 = vsel %vm268, %v265, 0
          %v312 = vsel %vm268, %v266, 0
          %v315 = vsel %vm268, %v267, 0
          %317 = vmatpush.msra.mxu0 0.0
          %318 = vmatpush.msra.mxu0 0.0
          %319 = vmatpush.msra.mxu0 0.0
          %320 = vmatpush.msra.mxu0 0.0
          %321 = vmatpush.msra.mxu0 0.0
          %322 = vmatpush.msra.mxu0 0.0
          %323 = vmatpush.msra.mxu0 0.0
          %324 = vmatpush.msra.mxu0 0.0
          %325 = vmatpush.msra.mxu0 0.0
          %326 = vmatpush.msra.mxu0 0.0
          %327 = vmatpush.msra.mxu0 0.0
          %328 = vmatpush.msra.mxu0 0.0
          %329 = vmatpush.msra.mxu0 0.0
          %330 = vmatpush.msra.mxu0 0.0
          %331 = vmatpush.msra.mxu0 0.0
          %332 = vmatpush.msra.mxu0 %v230
          %333 = vmatmul.f32.gmra.mxu0 %v270
          %v334 = vpop.f32.mrf.mxu0
          %v335 = vadd.f32 0.0, %v334
          %336 = vmatmul.f32.gmra.mxu0 %v273
          %v337 = vpop.f32.mrf.mxu0
          %v338 = vadd.f32 0.0, %v337
          %339 = vmatmul.f32.gmra.mxu0 %v276
          %v340 = vpop.f32.mrf.mxu0
          %v341 = vadd.f32 0.0, %v340
          %342 = vmatmul.f32.gmra.mxu0 %v279
          %v343 = vpop.f32.mrf.mxu0
          %v344 = vadd.f32 0.0, %v343
          %345 = vmatmul.f32.gmra.mxu0 %v282
          %v346 = vpop.f32.mrf.mxu0
          %v347 = vadd.f32 0.0, %v346
          %348 = vmatmul.f32.gmra.mxu0 %v285
          %v349 = vpop.f32.mrf.mxu0
          %v350 = vadd.f32 0.0, %v349
          %351 = vmatmul.f32.gmra.mxu0 %v288
          %v352 = vpop.f32.mrf.mxu0
          %v353 = vadd.f32 0.0, %v352
          %354 = vmatmul.f32.gmra.mxu0 %v291
          %v355 = vpop.f32.mrf.mxu0
          %v356 = vadd.f32 0.0, %v355
          %357 = vmatmul.f32.gmra.mxu0 %v294
          %v358 = vpop.f32.mrf.mxu0
          %v359 = vadd.f32 0.0, %v358
          %360 = vmatmul.f32.gmra.mxu0 %v297
          %v361 = vpop.f32.mrf.mxu0
          %v362 = vadd.f32 0.0, %v361
          %363 = vmatmul.f32.gmra.mxu0 %v300
          %v364 = vpop.f32.mrf.mxu0
          %v365 = vadd.f32 0.0, %v364
          %366 = vmatmul.f32.gmra.mxu0 %v303
          %v367 = vpop.f32.mrf.mxu0
          %v368 = vadd.f32 0.0, %v367
          %369 = vmatmul.f32.gmra.mxu0 %v306
          %v370 = vpop.f32.mrf.mxu0
          %v371 = vadd.f32 0.0, %v370
          %372 = vmatmul.f32.gmra.mxu0 %v309
          %v373 = vpop.f32.mrf.mxu0
          %v374 = vadd.f32 0.0, %v373
          %375 = vmatmul.f32.gmra.mxu0 %v312
          %v376 = vpop.f32.mrf.mxu0
          %v377 = vadd.f32 0.0, %v376
          %378 = vmatmul.f32.gmra.mxu0 %v315
          %v379 = vpop.f32.mrf.mxu0
          %v380 = vadd.f32 0.0, %v379
          %381 = vdwg.mxu0
          %382 = vst [vmem:[#allocation2] sm:$0xff] %v335
          %383 = vst [vmem:[#allocation2 + $0x8] sm:$0xff] %v338
          %384 = vst [vmem:[#allocation2 + $0x10] sm:$0xff] %v341
          %385 = vst [vmem:[#allocation2 + $0x18] sm:$0xff] %v344
          %386 = vst [vmem:[#allocation2 + $0x20] sm:$0xff] %v347
          %387 = vst [vmem:[#allocation2 + $0x28] sm:$0xff] %v350
          %388 = vst [vmem:[#allocation2 + $0x30] sm:$0xff] %v353
          %389 = vst [vmem:[#allocation2 + $0x38] sm:$0xff] %v356
          %390 = vst [vmem:[#allocation2 + $0x40] sm:$0xff] %v359
          %391 = vst [vmem:[#allocation2 + $0x48] sm:$0xff] %v362
          %392 = vst [vmem:[#allocation2 + $0x50] sm:$0xff] %v365
          %393 = vst [vmem:[#allocation2 + $0x58] sm:$0xff] %v368
          %394 = vst [vmem:[#allocation2 + $0x60] sm:$0xff] %v371
          %395 = vst [vmem:[#allocation2 + $0x68] sm:$0xff] %v374
          %396 = vst [vmem:[#allocation2 + $0x70] sm:$0xff] %v377
          %397 = vst [vmem:[#allocation2 + $0x78] sm:$0xff] %v380
        $region36: #{e_attention.1} parent=31 // pred_fallthru
          _
        %v398 = vld [vmem:[%s216] sm:$0xff]
        %v399 = vmul.f32 %v398, %v398
        %400 = vadd.xlane.f32.xlu0 %v399
        %v401 = vpop.xlane.xlu0 %400
        %v402 = vrcp.pop %v401
        %v403 = vmul.f32 %v402, 0.03125
        %v404 = vmul.f32 %v398, %v403
        %v405 = vld [vmem:[#allocation2] sm:$0xff]
        %v406 = vld [vmem:[#allocation2 + $0x8] sm:$0xff]
        %v407 = vld [vmem:[#allocation2 + $0x10] sm:$0xff]
        %v408 = vld [vmem:[#allocation2 + $0x18] sm:$0xff]
        %v409 = vld [vmem:[#allocation2 + $0x20] sm:$0xff]
        %v410 = vld [vmem:[#allocation2 + $0x28] sm:$0xff]
        %v411 = vld [vmem:[#allocation2 + $0x30] sm:$0xff]
        %v412 = vld [vmem:[#allocation2 + $0x38] sm:$0xff]
        %v413 = vld [vmem:[#allocation2 + $0x40] sm:$0xff]
        %v414 = vld [vmem:[#allocation2 + $0x48] sm:$0xff]
        %v415 = vld [vmem:[#allocation2 + $0x50] sm:$0xff]
        %v416 = vld [vmem:[#allocation2 + $0x58] sm:$0xff]
        %v417 = vld [vmem:[#allocation2 + $0x60] sm:$0xff]
        %v418 = vld [vmem:[#allocation2 + $0x68] sm:$0xff]
        %v419 = vld [vmem:[#allocation2 + $0x70] sm:$0xff]
        %v420 = vld [vmem:[#allocation2 + $0x78] sm:$0xff]
        %421 = vmatpush.msra.mxu0 %v420
        %422 = vmatpush.msra.mxu0 %v419
        %423 = vmatpush.msra.mxu0 %v418
        %424 = vmatpush.msra.mxu0 %v417
        %425 = vmatpush.msra.mxu0 %v416
        %426 = vmatpush.msra.mxu0 %v415
        %427 = vmatpush.msra.mxu0 %v414
        %428 = vmatpush.msra.mxu0 %v413
        %429 = vmatpush.msra.mxu0 %v412
        %430 = vmatpush.msra.mxu0 %v411
        %431 = vmatpush.msra.mxu0 %v410
        %432 = vmatpush.msra.mxu0 %v409
        %433 = vmatpush.msra.mxu0 %v408
        %434 = vmatpush.msra.mxu0 %v407
        %435 = vmatpush.msra.mxu0 %v406
        %436 = vmatpush.msra.mxu0 %v405
        %437 = vmatmul.f32.gmra.mxu0 %v404
        %v438 = vpop.f32.mrf.mxu0
        %v439 = vadd.f32 0.0, %v438
        %440 = vdwg.mxu0
        %441 = vst [vmem:[%s209] sm:$0xff] %v439
        %s442 = sand.u32 %s119, 1
        %s443 = scalar_lea.sflag [#allocation4], %s442
        %s444 = sand.u32 %s119, 1
        %s445 = smul.addr %s444, 8
        %s446 = scalar_lea.vmem [#allocation3], %s445
        // Predicated region
        $region37: #{e_attention.1} parent=31 // pred_check
          %p447 = pneg %p129
        $region38: #{e_attention.1} parent=31 // pred_check_branch
          %449 = sbr.rel (%p447) target = $region40
        $region39: #{e_attention.1} parent=31 // pred_region
          %451 = vsyncadd %s443, 0
          %s452 = sadd.s32 %s22, %s21
          %s453 = smul.addr %s452, 8
          %s454 = scalar_lea.hbm %s3, %s453
          %s456 = sshll.u32 %s446, 4
          %s457 = int_to_ptr.vmem [resolvable:$true] %s456
          %s458 = sshll.u32 %s454, 4
          %s459 = int_to_ptr.hbm [resolvable:$true] %s458
          %461 = dma.vmem_to_hbm [thread:$0]  %s457, 128, %s459, %s443
        $region40: #{e_attention.1} parent=31 // pred_fallthru
          _
      $region32: #{e_attention.1} parent=5 // pred_fallthru
        _
      %p462 = scmp.le.s32.totalorder 2, %s12
      // Predicated region
      $region41: #{e_attention.1} parent=5 // pred_check
        %p463 = pneg %p462
      $region42: #{e_attention.1} parent=5 // pred_check_branch
        %465 = sbr.rel (%p463) target = $region44
      $region43: #{e_attention.1} parent=5 // pred_region
        %s466 = ssub.s32 %s12, 2
        // Predicated region
        $region45: #{e_attention.1} parent=43 // pred_check
          %p467 = pneg %p135
        $region46: #{e_attention.1} parent=43 // pred_check_branch
          %469 = sbr.rel (%p467) target = $region48
        $region47: #{e_attention.1} parent=43 // pred_region
          %s470 = sand.u32 %s120, 1
          %s471 = scalar_lea.sflag [#allocation4], %s470
          %s472 = sand.u32 %s120, 1
          %s473 = smul.addr %s472, 8
          %s474 = scalar_lea.vmem [#allocation3], %s473
          %476 = dma.done %s471, 128
        $region48: #{e_attention.1} parent=43 // pred_fallthru
          _
      $region44: #{e_attention.1} parent=5 // pred_fallthru
        _
    $region6: #{e_attention.1} parent=1 // loop_footer
      %s16 = sadd.s32 1, %s12
    $region7: #{e_attention.1} parent=1 // loop_footer_branch
      %11 = sbr.rel target = $region3
    $region8: #{e_attention.1} parent=1 // loop_exit
      _
    %477 = vsyncpa [#allocation4], 1
    %s478 = scalar_lea.sflag [#allocation4], 1
    %479 = vsyncpa %s478, 1

</llo_original>
